<compile_context>
chip_gen: v7x
topology: tpu7x:2x2x1
jax: 0.10.0
libtpu: 0.0.40
codegen_flags: <defaults>
</compile_context>

<pallas_src>
import jax
import jax.numpy as jnp
from jax.experimental import pallas as pl
from jax.experimental.pallas import tpu as pltpu

IN_DIM = 84
HID_DIM = 58
OUT_DIM = 10
OUT_PAD = 128          # lane-dense output width (multiple of 128)
NEG_SLOPE = 0.01       # PyTorch LeakyReLU default
NEG_BIG = -1.0e30      # bias for padded output lanes -> exp() == 0 exactly


def _leaky_relu(x):
    return jnp.where(x > 0, x, NEG_SLOPE * x)


def _round_up(n, m):
    return (n + m - 1) // m * m


def class_projector_kernel(x_ref, w1_ref, b1_ref, w2_ref, b2_ref, o_ref):
    x = x_ref[...]                                            # (TILE_B, 84)
    # fc1 + LeakyReLU (f32 accumulation on the MXU)
    h = jnp.dot(x, w1_ref[...], preferred_element_type=jnp.float32)
    h = _leaky_relu(h + b1_ref[...])                          # (TILE_B, 58) f32
    # fc2 (output lane-padded to 128: padded cols have w=0, b=-1e30) + LeakyReLU
    h = h.astype(w2_ref.dtype)
    z = jnp.dot(h, w2_ref[...], preferred_element_type=jnp.float32)
    z = _leaky_relu(z + b2_ref[...])                          # (TILE_B, 128) f32
    # Numerically stable softmax; padded lanes are ~-1e28 -> exp == 0,
    # so they contribute nothing to the sum and store exact zeros.
    z = z - jnp.max(z, axis=-1, keepdims=True)
    e = jnp.exp(z)
    inv = pl.reciprocal(jnp.sum(e, axis=-1, keepdims=True), approx=True)
    o_ref[...] = e * inv


def class_projector(x, w1, b1, w2, b2, *, tile_b=2048, io_dtype=jnp.float32):
    """x: (B, 84). w1: (84, 58), b1: (1, 58), w2: (58, 10), b2: (1, 10).

    io_dtype controls the dtype of x / weights as shipped over HBM and fed to
    the MXU (jnp.bfloat16 halves input bandwidth on v6e/v7x); accumulation,
    biases, activations and the softmax stay float32.
    """
    B = x.shape[0]

    # Batch-tile alignment: 8 rows for 4-byte dtypes, 16 for bf16.
    align = max(8, 32 // jnp.dtype(io_dtype).itemsize)
    tile_b_eff = min(tile_b, _round_up(max(B, 1), align))
    tile_b_eff = _round_up(tile_b_eff, align)
    Bp = _round_up(B, tile_b_eff)
    if Bp != B:
        x = jnp.pad(x, ((0, Bp - B), (0, 0)))

    # Lane-dense output: pad fc2 to 128 output lanes.
    w2p = jnp.pad(w2, ((0, 0), (0, OUT_PAD - OUT_DIM)))
    b2p = jnp.pad(b2, ((0, 0), (0, OUT_PAD - OUT_DIM)), constant_values=NEG_BIG)

    x = x.astype(io_dtype)
    w1c = w1.astype(io_dtype)
    w2p = w2p.astype(io_dtype)
    b1c = b1.astype(jnp.float32)
    b2p = b2p.astype(jnp.float32)

    grid = (Bp // tile_b_eff,)
    out = pl.pallas_call(
        class_projector_kernel,
        out_shape=jax.ShapeDtypeStruct((Bp, OUT_PAD), jnp.float32),
        grid_spec=pltpu.PrefetchScalarGridSpec(
            num_scalar_prefetch=0,
            grid=grid,
            in_specs=[
                pl.BlockSpec((tile_b_eff, IN_DIM), lambda i: (i, 0)),
                pl.BlockSpec((IN_DIM, HID_DIM), lambda i: (0, 0)),
                pl.BlockSpec((1, HID_DIM), lambda i: (0, 0)),
                pl.BlockSpec((HID_DIM, OUT_PAD), lambda i: (0, 0)),
                pl.BlockSpec((1, OUT_PAD), lambda i: (0, 0)),
            ],
            out_specs=pl.BlockSpec((tile_b_eff, OUT_PAD), lambda i: (i, 0)),
        ),
        compiler_params=pltpu.CompilerParams(
            dimension_semantics=("parallel",),
        ),
    )(x, w1c, b1c, w2p, b2p)
    return out[:B, :OUT_DIM]


def init_params(key):
    """Deterministic init mirroring PyTorch Linear default (uniform +-1/sqrt(fan_in))."""
    k1, k2, k3, k4 = jax.random.split(key, 4)
    bound1 = 1.0 / jnp.sqrt(IN_DIM)
    bound2 = 1.0 / jnp.sqrt(HID_DIM)
    # stored transposed: (in, out)
    w1 = jax.random.uniform(k1, (IN_DIM, HID_DIM), jnp.float32, -bound1, bound1)
    b1 = jax.random.uniform(k2, (1, HID_DIM), jnp.float32, -bound1, bound1)
    w2 = jax.random.uniform(k3, (HID_DIM, OUT_DIM), jnp.float32, -bound2, bound2)
    b2 = jax.random.uniform(k4, (1, OUT_DIM), jnp.float32, -bound2, bound2)
    return w1, b1, w2, b2


def reference(x, w1, b1, w2, b2):
    h = jax.nn.leaky_relu(x @ w1 + b1, NEG_SLOPE)
    z = jax.nn.leaky_relu(h @ w2 + b2, NEG_SLOPE)
    return jax.nn.softmax(z, axis=-1)


if __name__ == "__main__":
    key = jax.random.PRNGKey(0)
    kx, kx2, kp = jax.random.split(key, 3)
    w1, b1, w2, b2 = init_params(kp)

    # --- small-batch check (single tile, grid=(1,)), f32 I/O ---
    B = 8
    x = jax.random.normal(kx, (B, IN_DIM), jnp.float32)
    out = jax.block_until_ready(class_projector(x, w1, b1, w2, b2))
    ref = reference(x, w1, b1, w2, b2)
    assert out.shape == (B, OUT_DIM)
    assert jnp.allclose(out, ref, atol=1e-3, rtol=1e-3), (
        f"f32 small-batch max abs err = {jnp.max(jnp.abs(out - ref))}"
    )

    # --- multi-tile check (grid > 1, batch not a multiple of the tile) ---
    B2 = 1000
    x2 = jax.random.normal(kx2, (B2, IN_DIM), jnp.float32)
    out2 = jax.block_until_ready(class_projector(x2, w1, b1, w2, b2, tile_b=256))
    ref2 = reference(x2, w1, b1, w2, b2)
    assert out2.shape == (B2, OUT_DIM)
    assert jnp.allclose(out2, ref2, atol=1e-3, rtol=1e-3), (
        f"f32 tiled max abs err = {jnp.max(jnp.abs(out2 - ref2))}"
    )

    # --- bf16 I/O path (v6e/v7x bandwidth optimization), relaxed tolerance ---
    out3 = jax.block_until_ready(
        class_projector(x2, w1, b1, w2, b2, tile_b=256, io_dtype=jnp.bfloat16)
    )
    assert jnp.allclose(out3, ref2, atol=3e-2, rtol=3e-2), (
        f"bf16 tiled max abs err = {jnp.max(jnp.abs(out3 - ref2))}"
    )

    print("KERNEL_OK")
</pallas_src>

<mosaic_0001>
module attributes {stable_mosaic.version = 11 : i64} {
  func.func @class_projector_kernel(%arg0: i32, %arg1: memref<8x84xf32, #tpu.memory_space<vmem>>, %arg2: memref<84x58xf32, #tpu.memory_space<vmem>>, %arg3: memref<1x58xf32, #tpu.memory_space<vmem>>, %arg4: memref<58x128xf32, #tpu.memory_space<vmem>>, %arg5: memref<1x128xf32, #tpu.memory_space<vmem>>, %arg6: memref<8x128xf32, #tpu.memory_space<vmem>>) attributes {dimension_semantics = [#tpu.dimension_semantics<parallel>], iteration_bounds = array<i64: 1>, scalar_prefetch = 0 : i64, scratch_operands = 0 : i64, tpu.core_type = #tpu.core_type<tc>, window_params = [{transform_indices = @transform_0, window_bounds = array<i64: 8, 84>}, {pipeline_mode = #tpu.pipeline_mode<synchronous>, transform_indices = @transform_1, window_bounds = array<i64: 84, 58>}, {pipeline_mode = #tpu.pipeline_mode<synchronous>, transform_indices = @transform_2, window_bounds = array<i64: 1, 58>}, {pipeline_mode = #tpu.pipeline_mode<synchronous>, transform_indices = @transform_3, window_bounds = array<i64: 58, 128>}, {pipeline_mode = #tpu.pipeline_mode<synchronous>, transform_indices = @transform_4, window_bounds = array<i64: 1, 128>}, {transform_indices = @transform_5, window_bounds = array<i64: 8, 128>}]} {
    %c0 = arith.constant 0 : index
    %c0_0 = arith.constant 0 : index
    %0 = vector.load %arg1[%c0, %c0_0] : memref<8x84xf32, #tpu.memory_space<vmem>>, vector<8x84xf32>
    %c0_1 = arith.constant 0 : index
    %c0_2 = arith.constant 0 : index
    %1 = vector.load %arg2[%c0_1, %c0_2] : memref<84x58xf32, #tpu.memory_space<vmem>>, vector<84x58xf32>
    %cst = arith.constant dense<0.000000e+00> : vector<8x58xf32>
    %2 = tpu.matmul %0, %1, %cst {dimension_numbers = #tpu.dot_dimension_numbers<[1], [0], [0], [1], [0, 0, 1, 1], [], []>} : vector<8x84xf32>, vector<84x58xf32>, vector<8x58xf32> -> vector<8x58xf32>
    %c0_3 = arith.constant 0 : index
    %c0_4 = arith.constant 0 : index
    %3 = vector.load %arg3[%c0_3, %c0_4] : memref<1x58xf32, #tpu.memory_space<vmem>>, vector<1x58xf32>
    %4 = vector.broadcast %3 : vector<1x58xf32> to vector<8x58xf32>
    %5 = arith.addf %2, %4 : vector<8x58xf32>
    %cst_5 = arith.constant 0.000000e+00 : f32
    %6 = vector.broadcast %cst_5 : f32 to vector<8x58xf32>
    %7 = arith.cmpf ogt, %5, %6 : vector<8x58xf32>
    %cst_6 = arith.constant 0.00999999977 : f32
    %8 = vector.broadcast %cst_6 : f32 to vector<8x58xf32>
    %9 = arith.mulf %8, %5 : vector<8x58xf32>
    %10 = arith.select %7, %5, %9 : vector<8x58xi1>, vector<8x58xf32>
    %c0_7 = arith.constant 0 : index
    %c0_8 = arith.constant 0 : index
    %11 = vector.load %arg4[%c0_7, %c0_8] : memref<58x128xf32, #tpu.memory_space<vmem>>, vector<58x128xf32>
    %cst_9 = arith.constant dense<0.000000e+00> : vector<8x128xf32>
    %12 = tpu.matmul %10, %11, %cst_9 {dimension_numbers = #tpu.dot_dimension_numbers<[1], [0], [0], [1], [0, 0, 1, 1], [], []>} : vector<8x58xf32>, vector<58x128xf32>, vector<8x128xf32> -> vector<8x128xf32>
    %c0_10 = arith.constant 0 : index
    %c0_11 = arith.constant 0 : index
    %13 = vector.load %arg5[%c0_10, %c0_11] : memref<1x128xf32, #tpu.memory_space<vmem>>, vector<1x128xf32>
    %14 = vector.broadcast %13 : vector<1x128xf32> to vector<8x128xf32>
    %15 = arith.addf %12, %14 : vector<8x128xf32>
    %cst_12 = arith.constant 0.000000e+00 : f32
    %16 = vector.broadcast %cst_12 : f32 to vector<8x128xf32>
    %17 = arith.cmpf ogt, %15, %16 : vector<8x128xf32>
    %cst_13 = arith.constant 0.00999999977 : f32
    %18 = vector.broadcast %cst_13 : f32 to vector<8x128xf32>
    %19 = arith.mulf %18, %15 : vector<8x128xf32>
    %20 = arith.select %17, %15, %19 : vector<8x128xi1>, vector<8x128xf32>
    %cst_14 = arith.constant dense<0xFF800000> : vector<8xf32>
    %21 = vector.multi_reduction <maximumf>, %20, %cst_14 [1] : vector<8x128xf32> to vector<8xf32>
    %22 = vector.shape_cast %21 : vector<8xf32> to vector<8x1xf32>
    %23 = vector.broadcast %22 : vector<8x1xf32> to vector<8x128xf32>
    %24 = arith.subf %20, %23 : vector<8x128xf32>
    %25 = math.exp %24 : vector<8x128xf32>
    %cst_15 = arith.constant dense<0.000000e+00> : vector<8xf32>
    %26 = vector.multi_reduction <add>, %25, %cst_15 [1] : vector<8x128xf32> to vector<8xf32>
    %27 = vector.shape_cast %26 : vector<8xf32> to vector<8x1xf32>
    %28 = tpu.reciprocal %27 {approx = true} : vector<8x1xf32> -> vector<8x1xf32>
    %29 = vector.broadcast %28 : vector<8x1xf32> to vector<8x128xf32>
    %30 = arith.mulf %25, %29 : vector<8x128xf32>
    %c0_16 = arith.constant 0 : index
    %c0_17 = arith.constant 0 : index
    %31 = vector.load %arg6[%c0_16, %c0_17] : memref<8x128xf32, #tpu.memory_space<vmem>>, vector<8x128xf32>
    tpu.vector_store %arg6[%c0_16, %c0_17], %30 {strides = array<i32>} : memref<8x128xf32, #tpu.memory_space<vmem>>, vector<8x128xf32>,
    return
  }
  func.func @transform_0(%arg0: i32) -> (i32, i32) {
    %c0_i32 = arith.constant 0 : i32
    %c0_i32_0 = arith.constant 0 : i32
    return %arg0, %c0_i32 : i32, i32
  }
  func.func @transform_1(%arg0: i32) -> (i32, i32) {
    %c0_i32 = arith.constant 0 : i32
    %c0_i32_0 = arith.constant 0 : i32
    %c0_i32_1 = arith.constant 0 : i32
    return %c0_i32, %c0_i32_0 : i32, i32
  }
  func.func @transform_2(%arg0: i32) -> (i32, i32) {
    %c0_i32 = arith.constant 0 : i32
    %c0_i32_0 = arith.constant 0 : i32
    %c0_i32_1 = arith.constant 0 : i32
    return %c0_i32, %c0_i32_0 : i32, i32
  }
  func.func @transform_3(%arg0: i32) -> (i32, i32) {
    %c0_i32 = arith.constant 0 : i32
    %c0_i32_0 = arith.constant 0 : i32
    %c0_i32_1 = arith.constant 0 : i32
    return %c0_i32, %c0_i32_0 : i32, i32
  }
  func.func @transform_4(%arg0: i32) -> (i32, i32) {
    %c0_i32 = arith.constant 0 : i32
    %c0_i32_0 = arith.constant 0 : i32
    %c0_i32_1 = arith.constant 0 : i32
    return %c0_i32, %c0_i32_0 : i32, i32
  }
  func.func @transform_5(%arg0: i32) -> (i32, i32) {
    %c0_i32 = arith.constant 0 : i32
    %c0_i32_0 = arith.constant 0 : i32
    return %arg0, %c0_i32 : i32, i32
  }
}

</mosaic_0001>

<llo_original>
// kernel: tpu_custom_call.1
$region0: #{tpu_custom_call.1}
  #allocation0 [shape = 'u32[]', space=smem, size = 0x4, offset = 0x4, fixed_abs, tag = 'smem constant byte address 0x4 - core index']
  #allocation1 [shape = 'u32[144,128]{1,0:T(1,128)}', space=vmem, size = 0x12000, scoped, tag = 'internal scratch']
  %s0 = inlined_call_operand.vmem [shape: f32[8,84], index: 0, kind: input, shape index: {}]
  %s1 = inlined_call_operand.vmem [shape: f32[84,58], index: 1, kind: input, shape index: {}]
  %s2 = inlined_call_operand.vmem [shape: f32[1,58], index: 2, kind: input, shape index: {}]
  %s3 = inlined_call_operand.vmem [shape: f32[58,128], index: 3, kind: input, shape index: {}]
  %s4 = inlined_call_operand.vmem [shape: f32[1,128], index: 4, kind: input, shape index: {}]
  %s5 = inlined_call_operand.hbm [shape: f32[8,128], index: 5, kind: output, shape index: {}]
  %s6 = sld [smem:[#allocation0]]
  $region30: #{tpu_custom_call.1} parent=0
    _
  %s8 = ssub.s32 1, %s6
  %s9 = scalar_select 0, %s8, %s6
  $region1: #{tpu_custom_call.1} parent=0
    #allocation2 [shape = 'u8[4096]{0}', space=vmem, size = 0x1000, scoped, tag = 'output window, operand 0, single buffered']
    #allocation3 [shape = 's32[1]{0}', space=sflag, size = 0x4, scoped, tag = 'scoped memory for tpu_custom_call.1']
    %10 = vsyncpa [#allocation3], 0
    // Predicated region
    $region2: #{tpu_custom_call.1} parent=1 // pred_check
      _
    $region3: #{tpu_custom_call.1} parent=1 // pred_check_branch
      %12 = sbr.rel (0) target = $region5
    $region4: #{tpu_custom_call.1} parent=1 // pred_region
      _
    $region5: #{tpu_custom_call.1} parent=1 // pred_fallthru
      _
    // Predicated region
    $region6: #{tpu_custom_call.1} parent=1 // pred_check
      _
    $region7: #{tpu_custom_call.1} parent=1 // pred_check_branch
      %14 = sbr.rel (0) target = $region9
    $region8: #{tpu_custom_call.1} parent=1 // pred_region
      _
    $region9: #{tpu_custom_call.1} parent=1 // pred_fallthru
      _
    // Predicated region
    $region10: #{tpu_custom_call.1} parent=1 // pred_check
      _
    $region11: #{tpu_custom_call.1} parent=1 // pred_check_branch
      %16 = sbr.rel (0) target = $region13
    $region12: #{tpu_custom_call.1} parent=1 // pred_region
      _
    $region13: #{tpu_custom_call.1} parent=1 // pred_fallthru
      _
    // Predicated region
    $region14: #{tpu_custom_call.1} parent=1 // pred_check
      _
    $region15: #{tpu_custom_call.1} parent=1 // pred_check_branch
      %18 = sbr.rel (0) target = $region17
    $region16: #{tpu_custom_call.1} parent=1 // pred_region
      _
    $region17: #{tpu_custom_call.1} parent=1 // pred_fallthru
      _
    // Predicated region
    $region18: #{tpu_custom_call.1} parent=1 // pred_check
      _
    $region19: #{tpu_custom_call.1} parent=1 // pred_check_branch
      %20 = sbr.rel (0) target = $region21
    $region20: #{tpu_custom_call.1} parent=1 // pred_region
      _
    $region21: #{tpu_custom_call.1} parent=1 // pred_fallthru
      _
    %v21 = vld [vmem:[%s0] sm:$0xff]
    %v22 = vld [vmem:[%s1] sm:$0xff]
    %v23 = vld [vmem:[%s1 + $0x8] sm:$0xff]
    %v24 = vld [vmem:[%s1 + $0x10] sm:$0xff]
    %v25 = vld [vmem:[%s1 + $0x18] sm:$0xff]
    %v26 = vld [vmem:[%s1 + $0x20] sm:$0xff]
    %v27 = vld [vmem:[%s1 + $0x28] sm:$0xff]
    %v28 = vld [vmem:[%s1 + $0x30] sm:$0xff]
    %v29 = vld [vmem:[%s1 + $0x38] sm:$0xff]
    %v30 = vld [vmem:[%s1 + $0x40] sm:$0xff]
    %v31 = vld [vmem:[%s1 + $0x48] sm:$0xff]
    %v32 = vld [vmem:[%s1 + $0x50] sm:$0xf]
    %v33 = vld [vmem:[%s2] sm:$0x1]
    %v35 = vlaneseq
    %v36 = vshrl.u32 %v35, 7
    %v37 = vsub.s32 0, %v36
    %v38 = vrot.slane %v33, %v37
    %vm40 = vcmask 687104
    %v42 = vsel %vm40, %v21, 0
    %vm44 = vcmask 1043456
    %v46 = vsel %vm44, %v32, 0
    %48 = vmatprep.subr.mxu0 0.0
    %49 = vmatpush1.msra.mxu0 %v22
    %50 = vmatprep.subr.mxu0 0.0
    %51 = vmatpush1.msra.mxu0 %v23
    %52 = vmatprep.subr.mxu0 0.0
    %53 = vmatpush1.msra.mxu0 %v24
    %54 = vmatprep.subr.mxu0 0.0
    %55 = vmatpush1.msra.mxu0 %v25
    %56 = vmatprep.subr.mxu0 0.0
    %57 = vmatpush1.msra.mxu0 %v26
    %58 = vmatprep.subr.mxu0 0.0
    %59 = vmatpush1.msra.mxu0 %v27
    %60 = vmatprep.subr.mxu0 0.0
    %61 = vmatpush1.msra.mxu0 %v28
    %62 = vmatprep.subr.mxu0 0.0
    %63 = vmatpush1.msra.mxu0 %v29
    %64 = vmatprep.subr.mxu0 0.0
    %65 = vmatpush1.msra.mxu0 %v30
    %66 = vmatprep.subr.mxu0 0.0
    %67 = vmatpush1.msra.mxu0 %v31
    %68 = vmatprep.subr.mxu0 0.0
    %69 = vmatpush1.msra.mxu0 %v46
    %70 = vmatprep.subr.mxu0 0.0
    %71 = vmatpush1.msra.mxu0 0.0
    %72 = vmatprep.subr.mxu0 0.0
    %73 = vmatpush1.msra.mxu0 0.0
    %74 = vmatprep.subr.mxu0 0.0
    %75 = vmatpush1.msra.mxu0 0.0
    %76 = vmatprep.subr.mxu0 0.0
    %77 = vmatpush1.msra.mxu0 0.0
    %78 = vmatprep.subr.mxu0 0.0
    %79 = vmatpush1.msra.mxu0 0.0
    %80 = vmatprep.subr.mxu0 0.0
    %81 = vmatpush1.msra.mxu0 0.0
    %82 = vmatprep.subr.mxu0 0.0
    %83 = vmatpush1.msra.mxu0 0.0
    %84 = vmatprep.subr.mxu0 0.0
    %85 = vmatpush1.msra.mxu0 0.0
    %86 = vmatprep.subr.mxu0 0.0
    %87 = vmatpush1.msra.mxu0 0.0
    %88 = vmatprep.subr.mxu0 0.0
    %89 = vmatpush1.msra.mxu0 0.0
    %90 = vmatprep.subr.mxu0 0.0
    %91 = vmatpush1.msra.mxu0 0.0
    %92 = vmatprep.subr.mxu0 0.0
    %93 = vmatpush1.msra.mxu0 0.0
    %94 = vmatprep.subr.mxu0 0.0
    %95 = vmatpush1.msra.mxu0 0.0
    %96 = vmatprep.subr.mxu0 0.0
    %97 = vmatpush1.msra.mxu0 0.0
    %98 = vmatprep.subr.mxu0 0.0
    %99 = vmatpush1.msra.mxu0 0.0
    %100 = vmatprep.subr.mxu0 0.0
    %101 = vmatpush1.msra.mxu0 0.0
    %102 = vmatprep.subr.mxu0 0.0
    %103 = vmatpush1.msra.mxu0 0.0
    %104 = vmatprep.subr.mxu0 0.0
    %105 = vmatpush1.msra.mxu0 0.0
    %106 = vmatprep.subr.mxu0 0.0
    %107 = vmatpush1.msra.mxu0 0.0
    %108 = vmatprep.subr.mxu0 0.0
    %109 = vmatpush1.msra.mxu0 0.0
    %110 = vmatprep.subr.mxu0 0.0
    %111 = vmatpush1.msra.mxu0 0.0
    %112 = vmatprep.mubr.f32.mxu0 0.0
    %113 = vmatmul.mubr.f32.gmra.mrb[0].mxu0 %v42
    %v114 = vpop.f32.mrb[0].mxu0
    %v115 = vadd.f32 %v38, %v114
    %v116 = vpop.f32.mrb[0].mxu0
    %117 = vdwg.mxu0
    %vm118 = vcmp.gt.f32.partialorder %v115, 0.0
    %v119 = vmul.f32 %v115, 0.01
    %v120 = vsel %vm118, %v115, %v119
    %v121 = vld [vmem:[%s3] sm:$0xff]
    %v122 = vld [vmem:[%s3 + $0x8] sm:$0xff]
    %v123 = vld [vmem:[%s3 + $0x10] sm:$0xff]
    %v124 = vld [vmem:[%s3 + $0x18] sm:$0xff]
    %v125 = vld [vmem:[%s3 + $0x20] sm:$0xff]
    %v126 = vld [vmem:[%s3 + $0x28] sm:$0xff]
    %v127 = vld [vmem:[%s3 + $0x30] sm:$0xff]
    %v128 = vld [vmem:[%s3 + $0x38] sm:$0x3]
    %v129 = vld [vmem:[%s4] sm:$0x1]
    %v131 = vlaneseq
    %v132 = vshrl.u32 %v131, 7
    %v133 = vsub.s32 0, %v132
    %v134 = vrot.slane %v129, %v133
    %vm136 = vcmask 474112
    %v138 = vsel %vm136, %v120, 0
    %vm140 = vcmask 1041408
    %v142 = vsel %vm140, %v128, 0
    %144 = vmatprep.subr.mxu0 0.0
    %145 = vmatpush1.msra.mxu0 %v121
    %146 = vmatprep.subr.mxu0 0.0
    %147 = vmatpush1.msra.mxu0 %v122
    %148 = vmatprep.subr.mxu0 0.0
    %149 = vmatpush1.msra.mxu0 %v123
    %150 = vmatprep.subr.mxu0 0.0
    %151 = vmatpush1.msra.mxu0 %v124
    %152 = vmatprep.subr.mxu0 0.0
    %153 = vmatpush1.msra.mxu0 %v125
    %154 = vmatprep.subr.mxu0 0.0
    %155 = vmatpush1.msra.mxu0 %v126
    %156 = vmatprep.subr.mxu0 0.0
    %157 = vmatpush1.msra.mxu0 %v127
    %158 = vmatprep.subr.mxu0 0.0
    %159 = vmatpush1.msra.mxu0 %v142
    %160 = vmatprep.subr.mxu0 0.0
    %161 = vmatpush1.msra.mxu0 0.0
    %162 = vmatprep.subr.mxu0 0.0
    %163 = vmatpush1.msra.mxu0 0.0
    %164 = vmatprep.subr.mxu0 0.0
    %165 = vmatpush1.msra.mxu0 0.0
    %166 = vmatprep.subr.mxu0 0.0
    %167 = vmatpush1.msra.mxu0 0.0
    %168 = vmatprep.subr.mxu0 0.0
    %169 = vmatpush1.msra.mxu0 0.0
    %170 = vmatprep.subr.mxu0 0.0
    %171 = vmatpush1.msra.mxu0 0.0
    %172 = vmatprep.subr.mxu0 0.0
    %173 = vmatpush1.msra.mxu0 0.0
    %174 = vmatprep.subr.mxu0 0.0
    %175 = vmatpush1.msra.mxu0 0.0
    %176 = vmatprep.subr.mxu0 0.0
    %177 = vmatpush1.msra.mxu0 0.0
    %178 = vmatprep.subr.mxu0 0.0
    %179 = vmatpush1.msra.mxu0 0.0
    %180 = vmatprep.subr.mxu0 0.0
    %181 = vmatpush1.msra.mxu0 0.0
    %182 = vmatprep.subr.mxu0 0.0
    %183 = vmatpush1.msra.mxu0 0.0
    %184 = vmatprep.subr.mxu0 0.0
    %185 = vmatpush1.msra.mxu0 0.0
    %186 = vmatprep.subr.mxu0 0.0
    %187 = vmatpush1.msra.mxu0 0.0
    %188 = vmatprep.subr.mxu0 0.0
    %189 = vmatpush1.msra.mxu0 0.0
    %190 = vmatprep.subr.mxu0 0.0
    %191 = vmatpush1.msra.mxu0 0.0
    %192 = vmatprep.subr.mxu0 0.0
    %193 = vmatpush1.msra.mxu0 0.0
    %194 = vmatprep.subr.mxu0 0.0
    %195 = vmatpush1.msra.mxu0 0.0
    %196 = vmatprep.subr.mxu0 0.0
    %197 = vmatpush1.msra.mxu0 0.0
    %198 = vmatprep.subr.mxu0 0.0
    %199 = vmatpush1.msra.mxu0 0.0
    %200 = vmatprep.subr.mxu0 0.0
    %201 = vmatpush1.msra.mxu0 0.0
    %202 = vmatprep.subr.mxu0 0.0
    %203 = vmatpush1.msra.mxu0 0.0
    %204 = vmatprep.subr.mxu0 0.0
    %205 = vmatpush1.msra.mxu0 0.0
    %206 = vmatprep.subr.mxu0 0.0
    %207 = vmatpush1.msra.mxu0 0.0
    %208 = vmatprep.mubr.f32.mxu0 0.0
    %209 = vmatmul.mubr.f32.gmra.mrb[0].mxu0 %v138
    %v210 = vpop.f32.mrb[0].mxu0
    %v211 = vadd.f32 %v134, %v210
    %v212 = vpop.f32.mrb[0].mxu0
    %213 = vdwg.mxu0
    %vm214 = vcmp.gt.f32.partialorder %v211, 0.0
    %v215 = vmul.f32 %v211, 0.01
    %v216 = vsel %vm214, %v211, %v215
    %217 = vmax.xlane.f32.xlu0 %v216
    %v218 = vpop.xlane.xlu0 %217
    %v219 = vsub.f32 %v216, %v218
    %v220 = vmul.f32 %v219, 1.442695
    %v221 = vpow.pop %v220
    %222 = vadd.xlane.f32.xlu0 %v221
    %v223 = vpop.xlane.xlu0 %222
    %v224 = vrcp.pop %v223
    %v225 = vmul.f32 %v221, %v224
    %226 = vst [vmem:[#allocation2] sm:$0xff] %v225
    // Predicated region
    $region22: #{tpu_custom_call.1} parent=1 // pred_check
      _
    $region23: #{tpu_custom_call.1} parent=1 // pred_check_branch
      %228 = sbr.rel (0) target = $region25
    $region24: #{tpu_custom_call.1} parent=1 // pred_region
      %s230 = ssub.s32 128, 128
      %231 = vsyncadd [#allocation3], %s230
      %s233 = sshll.u32 [#allocation2], 4
      %s234 = int_to_ptr.vmem [resolvable:$true] %s233
      %236 = dma.vmem_to_hbm [thread:$0]  %s234, 128, %s5, [#allocation3]
    $region25: #{tpu_custom_call.1} parent=1 // pred_fallthru
      _
    // Predicated region
    $region26: #{tpu_custom_call.1} parent=1 // pred_check
      _
    $region27: #{tpu_custom_call.1} parent=1 // pred_check_branch
      %238 = sbr.rel (0) target = $region29
    $region28: #{tpu_custom_call.1} parent=1 // pred_region
      %239 = dma.done [#allocation3], 128
    $region29: #{tpu_custom_call.1} parent=1 // pred_fallthru
      _
    %240 = vsyncpa [#allocation3], 1

</llo_original>
